<compile_context>
chip_gen: v7x
topology: tpu7x:2x2x1
jax: 0.10.0
libtpu: 0.0.40
codegen_flags: <defaults>
</compile_context>

<pallas_src>
import jax
import jax.numpy as jnp
from jax.experimental import pallas as pl
from jax.experimental.pallas import tpu as pltpu

IN_DIM = 64
HIDDEN_PAD = 128   # lane-align the 64/32 hidden widths (exact zero padding)
OUT_DIM = 333      # stored directly; no 384-wide padded output in HBM


def _round_up(n, m):
    return ((n + m - 1) // m) * m


def _cdiv(a, b):
    return -(-a // b)


def mlp_kernel(x_ref,
               w1_ref, b1_ref,
               w2_ref, b2_ref,
               w3_ref, b3_ref,
               wo_ref, bo_ref,
               out_ref):
    """Whole-network fused forward on one (TB, ...) batch tile.

    BN is pre-folded into weights/biases, so each layer is an MXU matmul
    (bf16 inputs, f32 accumulation) + f32 bias add + ReLU.
    """
    # x arrives f32 from HBM; cast to bf16 in-kernel (no separate XLA cast op,
    # and the HBM read stays the minimal f32 input, re-read nowhere else).
    h = x_ref[...].astype(jnp.bfloat16)                                # (TB, 64)

    h = jnp.maximum(
        jnp.dot(h, w1_ref[...], preferred_element_type=jnp.float32)
        + b1_ref[...], 0.0).astype(jnp.bfloat16)                       # (TB, 128)

    h = jnp.maximum(
        jnp.dot(h, w2_ref[...], preferred_element_type=jnp.float32)
        + b2_ref[...], 0.0).astype(jnp.bfloat16)                       # (TB, 128)

    h = jnp.maximum(
        jnp.dot(h, w3_ref[...], preferred_element_type=jnp.float32)
        + b3_ref[...], 0.0).astype(jnp.bfloat16)                       # (TB, 128)

    out_ref[...] = (
        jnp.dot(h, wo_ref[...], preferred_element_type=jnp.float32)
        + bo_ref[...]).astype(out_ref.dtype)                           # (TB, 333)


def _fold_bn(w, b, gamma, beta, mean, var, eps=1e-5):
    """Fold eval-mode BatchNorm1d into the preceding Linear's weight/bias."""
    scale = gamma / jnp.sqrt(var + eps)
    shift = beta - mean * scale
    return w * scale[None, :], b * scale + shift


def _pad2(w, rows, cols):
    return jnp.pad(w, ((0, rows - w.shape[0]), (0, cols - w.shape[1])))


def _pad1(b, n):
    return jnp.pad(b, (0, n - b.shape[0]))


def _prepare_params(params):
    """BN-fold, zero-pad hidden widths to 128, cast weights to bf16.

    Zero padding keeps numerics exact: padded lanes stay 0 through ReLU and
    the corresponding (zero) weight rows contribute nothing downstream.
    The output layer keeps its true 333 columns (mask-stored by the kernel).
    """
    w1, b1 = _fold_bn(params["w1"], params["b1"], *params["bn1"])
    w2, b2 = _fold_bn(params["w2"], params["b2"], *params["bn2"])
    w3, b3 = _fold_bn(params["w3"], params["b3"], *params["bn3"])
    wo, bo = params["wo"], params["bo"]

    w2 = _pad2(w2, 128, HIDDEN_PAD);        b2 = _pad1(b2, HIDDEN_PAD)
    w3 = _pad2(w3, HIDDEN_PAD, HIDDEN_PAD); b3 = _pad1(b3, HIDDEN_PAD)
    wo = _pad2(wo, HIDDEN_PAD, OUT_DIM)     # pad input rows 32 -> 128 only

    bf = jnp.bfloat16
    f32 = jnp.float32
    return (w1.astype(bf), b1.reshape(1, -1).astype(f32),
            w2.astype(bf), b2.reshape(1, -1).astype(f32),
            w3.astype(bf), b3.reshape(1, -1).astype(f32),
            wo.astype(bf), bo.reshape(1, -1).astype(f32))


def _choose_tiles(B, block_rows):
    """Adaptive batch tile: minimal padding, 16-aligned, >=2 even tiles when
    there is enough work so both v7x TensorCores get batch tiles."""
    num_tiles = max(1, _cdiv(B, block_rows))
    if num_tiles == 1 and B >= 128:
        num_tiles = 2
    if num_tiles > 1 and num_tiles % 2:
        num_tiles += 1
    TB = _round_up(_cdiv(B, num_tiles), 16)   # 16: bf16 sublane pack (f32 needs 8)
    return TB, TB * num_tiles


def net_forward(x, params, *, block_rows=2048, out_dtype=jnp.float32):
    B, in_dim = x.shape
    assert in_dim == IN_DIM, in_dim

    wargs = _prepare_params(params)

    TB, padded_B = _choose_tiles(B, block_rows)
    if padded_B != B:
        x = jnp.pad(x, ((0, padded_B - B), (0, 0)))

    grid = (padded_B // TB,)
    tile_map = lambda i: (i, 0)     # batch-tiled arrays
    fixed_map = lambda i: (0, 0)    # constant block index -> weights stay
                                    # VMEM-resident; Pallas skips re-DMA when
                                    # the block index does not change.

    in_specs = [pl.BlockSpec((TB, IN_DIM), tile_map)]
    in_specs += [pl.BlockSpec(a.shape, fixed_map) for a in wargs]
    out_spec = pl.BlockSpec((TB, OUT_DIM), tile_map)

    flops = 2 * padded_B * (IN_DIM * 128
                            + 128 * HIDDEN_PAD
                            + HIDDEN_PAD * HIDDEN_PAD
                            + HIDDEN_PAD * OUT_DIM)
    bytes_accessed = (padded_B * (IN_DIM * 4
                                  + OUT_DIM * jnp.dtype(out_dtype).itemsize)
                      + sum(int(a.size) * a.dtype.itemsize for a in wargs))

    out = pl.pallas_call(
        mlp_kernel,
        out_shape=jax.ShapeDtypeStruct((padded_B, OUT_DIM), out_dtype),
        grid_spec=pltpu.PrefetchScalarGridSpec(
            num_scalar_prefetch=0,
            grid=grid,
            in_specs=in_specs,
            out_specs=out_spec,
        ),
        compiler_params=pltpu.CompilerParams(
            dimension_semantics=("parallel",),
            vmem_limit_bytes=32 * 1024 * 1024,
        ),
        cost_estimate=pl.CostEstimate(
            flops=flops, transcendentals=0, bytes_accessed=bytes_accessed),
    )(x, *wargs)

    # Columns are already exactly 333; only strip batch padding (contiguous
    # row prefix) when the adaptive tiling had to pad.
    return out if padded_B == B else out[:B]


def init_params(key):
    """Deterministic init matching the torch module's shapes.

    Linear weights stored as (in_features, out_features) == torch weight.T.
    BatchNorm params: (gamma, beta, running_mean, running_var).
    """
    def linear(key, fan_in, fan_out):
        kw, kb = jax.random.split(key)
        bound = 1.0 / jnp.sqrt(fan_in)
        w = jax.random.uniform(kw, (fan_in, fan_out), jnp.float32, -bound, bound)
        b = jax.random.uniform(kb, (fan_out,), jnp.float32, -bound, bound)
        return w, b

    def bn(key, n):
        k1, k2, k3 = jax.random.split(key, 3)
        gamma = 1.0 + 0.1 * jax.random.normal(k1, (n,), jnp.float32)
        beta = 0.1 * jax.random.normal(k2, (n,), jnp.float32)
        mean = 0.05 * jax.random.normal(k3, (n,), jnp.float32)
        var = jnp.ones((n,), jnp.float32)
        return gamma, beta, mean, var

    keys = jax.random.split(key, 7)
    w1, b1 = linear(keys[0], 64, 128)
    w2, b2 = linear(keys[1], 128, 64)
    w3, b3 = linear(keys[2], 64, 32)
    wo, bo = linear(keys[3], 32, 333)
    return {
        "w1": w1, "b1": b1, "bn1": bn(keys[4], 128),
        "w2": w2, "b2": b2, "bn2": bn(keys[5], 64),
        "w3": w3, "b3": b3, "bn3": bn(keys[6], 32),
        "wo": wo, "bo": bo,
    }


def net_forward_bf16_ref(x, params):
    """Pure-JAX reference mirroring the kernel's bf16-in / f32-accum math."""
    w1, b1, w2, b2, w3, b3, wo, bo = _prepare_params(params)
    h = x.astype(jnp.bfloat16)
    h = jnp.maximum(jnp.dot(h, w1, preferred_element_type=jnp.float32) + b1, 0.0)
    h = jnp.maximum(jnp.dot(h.astype(jnp.bfloat16), w2,
                            preferred_element_type=jnp.float32) + b2, 0.0)
    h = jnp.maximum(jnp.dot(h.astype(jnp.bfloat16), w3,
                            preferred_element_type=jnp.float32) + b3, 0.0)
    return jnp.dot(h.astype(jnp.bfloat16), wo,
                   preferred_element_type=jnp.float32) + bo


def net_forward_f32_ref(x, params):
    """Full-f32 reference matching torch eval-mode semantics."""
    def fold(gamma, beta, mean, var, eps=1e-5):
        s = gamma / jnp.sqrt(var + eps)
        return s, beta - mean * s
    s1, t1 = fold(*params["bn1"]); s2, t2 = fold(*params["bn2"]); s3, t3 = fold(*params["bn3"])
    h = jnp.maximum((x @ params["w1"] + params["b1"]) * s1 + t1, 0.0)
    h = jnp.maximum((h @ params["w2"] + params["b2"]) * s2 + t2, 0.0)
    h = jnp.maximum((h @ params["w3"] + params["b3"]) * s3 + t3, 0.0)
    return h @ params["wo"] + params["bo"]


if __name__ == "__main__":
    key = jax.random.PRNGKey(0)
    kx, kp = jax.random.split(key)
    B = 8
    x = jax.random.normal(kx, (B, 64), jnp.float32)
    params = init_params(kp)

    out = net_forward(x, params)
    out = jax.block_until_ready(out)
    assert out.shape == (B, 333), out.shape

    # Tight check against a bf16-consistent reference (same math as the kernel).
    ref_bf16 = net_forward_bf16_ref(x, params)
    assert jnp.allclose(out, ref_bf16, atol=1e-2, rtol=1e-2), \
        float(jnp.max(jnp.abs(out - ref_bf16)))

    # Loose sanity check against the full-f32 torch-equivalent semantics.
    ref_f32 = net_forward_f32_ref(x, params)
    assert jnp.allclose(out, ref_f32, atol=1.5e-1, rtol=1.5e-1), \
        float(jnp.max(jnp.abs(out - ref_f32)))

    print("KERNEL_OK")
</pallas_src>

<mosaic_0001>
module attributes {stable_mosaic.version = 11 : i64} {
  func.func @mlp_kernel(%arg0: i32, %arg1: memref<16x64xf32, #tpu.memory_space<vmem>>, %arg2: memref<64x128xbf16, #tpu.memory_space<vmem>>, %arg3: memref<1x128xf32, #tpu.memory_space<vmem>>, %arg4: memref<128x128xbf16, #tpu.memory_space<vmem>>, %arg5: memref<1x128xf32, #tpu.memory_space<vmem>>, %arg6: memref<128x128xbf16, #tpu.memory_space<vmem>>, %arg7: memref<1x128xf32, #tpu.memory_space<vmem>>, %arg8: memref<128x333xbf16, #tpu.memory_space<vmem>>, %arg9: memref<1x333xf32, #tpu.memory_space<vmem>>, %arg10: memref<16x333xf32, #tpu.memory_space<vmem>>) attributes {dimension_semantics = [#tpu.dimension_semantics<parallel>], iteration_bounds = array<i64: 1>, scalar_prefetch = 0 : i64, scratch_operands = 0 : i64, tpu.core_type = #tpu.core_type<tc>, window_params = [{transform_indices = @transform_0, window_bounds = array<i64: 16, 64>}, {pipeline_mode = #tpu.pipeline_mode<synchronous>, transform_indices = @transform_1, window_bounds = array<i64: 64, 128>}, {pipeline_mode = #tpu.pipeline_mode<synchronous>, transform_indices = @transform_2, window_bounds = array<i64: 1, 128>}, {pipeline_mode = #tpu.pipeline_mode<synchronous>, transform_indices = @transform_3, window_bounds = array<i64: 128, 128>}, {pipeline_mode = #tpu.pipeline_mode<synchronous>, transform_indices = @transform_4, window_bounds = array<i64: 1, 128>}, {pipeline_mode = #tpu.pipeline_mode<synchronous>, transform_indices = @transform_5, window_bounds = array<i64: 128, 128>}, {pipeline_mode = #tpu.pipeline_mode<synchronous>, transform_indices = @transform_6, window_bounds = array<i64: 1, 128>}, {pipeline_mode = #tpu.pipeline_mode<synchronous>, transform_indices = @transform_7, window_bounds = array<i64: 128, 333>}, {pipeline_mode = #tpu.pipeline_mode<synchronous>, transform_indices = @transform_8, window_bounds = array<i64: 1, 333>}, {transform_indices = @transform_9, window_bounds = array<i64: 16, 333>}]} {
    %c0 = arith.constant 0 : index
    %c0_0 = arith.constant 0 : index
    %0 = vector.load %arg1[%c0, %c0_0] : memref<16x64xf32, #tpu.memory_space<vmem>>, vector<16x64xf32>
    %1 = arith.truncf %0 : vector<16x64xf32> to vector<16x64xbf16>
    %c0_1 = arith.constant 0 : index
    %c0_2 = arith.constant 0 : index
    %2 = vector.load %arg2[%c0_1, %c0_2] : memref<64x128xbf16, #tpu.memory_space<vmem>>, vector<64x128xbf16>
    %cst = arith.constant dense<0.000000e+00> : vector<16x128xf32>
    %3 = tpu.matmul %1, %2, %cst {dimension_numbers = #tpu.dot_dimension_numbers<[1], [0], [0], [1], [0, 0, 1, 1], [], []>} : vector<16x64xbf16>, vector<64x128xbf16>, vector<16x128xf32> -> vector<16x128xf32>
    %c0_3 = arith.constant 0 : index
    %c0_4 = arith.constant 0 : index
    %4 = vector.load %arg3[%c0_3, %c0_4] : memref<1x128xf32, #tpu.memory_space<vmem>>, vector<1x128xf32>
    %5 = vector.broadcast %4 : vector<1x128xf32> to vector<16x128xf32>
    %6 = arith.addf %3, %5 : vector<16x128xf32>
    %cst_5 = arith.constant 0.000000e+00 : f32
    %7 = vector.broadcast %cst_5 : f32 to vector<16x128xf32>
    %8 = arith.maximumf %6, %7 : vector<16x128xf32>
    %9 = arith.truncf %8 : vector<16x128xf32> to vector<16x128xbf16>
    %c0_6 = arith.constant 0 : index
    %c0_7 = arith.constant 0 : index
    %10 = vector.load %arg4[%c0_6, %c0_7] : memref<128x128xbf16, #tpu.memory_space<vmem>>, vector<128x128xbf16>
    %cst_8 = arith.constant dense<0.000000e+00> : vector<16x128xf32>
    %11 = tpu.matmul %9, %10, %cst_8 {dimension_numbers = #tpu.dot_dimension_numbers<[1], [0], [0], [1], [0, 0, 1, 1], [], []>} : vector<16x128xbf16>, vector<128x128xbf16>, vector<16x128xf32> -> vector<16x128xf32>
    %c0_9 = arith.constant 0 : index
    %c0_10 = arith.constant 0 : index
    %12 = vector.load %arg5[%c0_9, %c0_10] : memref<1x128xf32, #tpu.memory_space<vmem>>, vector<1x128xf32>
    %13 = vector.broadcast %12 : vector<1x128xf32> to vector<16x128xf32>
    %14 = arith.addf %11, %13 : vector<16x128xf32>
    %cst_11 = arith.constant 0.000000e+00 : f32
    %15 = vector.broadcast %cst_11 : f32 to vector<16x128xf32>
    %16 = arith.maximumf %14, %15 : vector<16x128xf32>
    %17 = arith.truncf %16 : vector<16x128xf32> to vector<16x128xbf16>
    %c0_12 = arith.constant 0 : index
    %c0_13 = arith.constant 0 : index
    %18 = vector.load %arg6[%c0_12, %c0_13] : memref<128x128xbf16, #tpu.memory_space<vmem>>, vector<128x128xbf16>
    %cst_14 = arith.constant dense<0.000000e+00> : vector<16x128xf32>
    %19 = tpu.matmul %17, %18, %cst_14 {dimension_numbers = #tpu.dot_dimension_numbers<[1], [0], [0], [1], [0, 0, 1, 1], [], []>} : vector<16x128xbf16>, vector<128x128xbf16>, vector<16x128xf32> -> vector<16x128xf32>
    %c0_15 = arith.constant 0 : index
    %c0_16 = arith.constant 0 : index
    %20 = vector.load %arg7[%c0_15, %c0_16] : memref<1x128xf32, #tpu.memory_space<vmem>>, vector<1x128xf32>
    %21 = vector.broadcast %20 : vector<1x128xf32> to vector<16x128xf32>
    %22 = arith.addf %19, %21 : vector<16x128xf32>
    %cst_17 = arith.constant 0.000000e+00 : f32
    %23 = vector.broadcast %cst_17 : f32 to vector<16x128xf32>
    %24 = arith.maximumf %22, %23 : vector<16x128xf32>
    %25 = arith.truncf %24 : vector<16x128xf32> to vector<16x128xbf16>
    %c0_18 = arith.constant 0 : index
    %c0_19 = arith.constant 0 : index
    %26 = vector.load %arg8[%c0_18, %c0_19] : memref<128x333xbf16, #tpu.memory_space<vmem>>, vector<128x333xbf16>
    %cst_20 = arith.constant dense<0.000000e+00> : vector<16x333xf32>
    %27 = tpu.matmul %25, %26, %cst_20 {dimension_numbers = #tpu.dot_dimension_numbers<[1], [0], [0], [1], [0, 0, 1, 1], [], []>} : vector<16x128xbf16>, vector<128x333xbf16>, vector<16x333xf32> -> vector<16x333xf32>
    %c0_21 = arith.constant 0 : index
    %c0_22 = arith.constant 0 : index
    %28 = vector.load %arg9[%c0_21, %c0_22] : memref<1x333xf32, #tpu.memory_space<vmem>>, vector<1x333xf32>
    %29 = vector.broadcast %28 : vector<1x333xf32> to vector<16x333xf32>
    %30 = arith.addf %27, %29 : vector<16x333xf32>
    %c0_23 = arith.constant 0 : index
    %c0_24 = arith.constant 0 : index
    %31 = vector.load %arg10[%c0_23, %c0_24] : memref<16x333xf32, #tpu.memory_space<vmem>>, vector<16x333xf32>
    tpu.vector_store %arg10[%c0_23, %c0_24], %30 {strides = array<i32>} : memref<16x333xf32, #tpu.memory_space<vmem>>, vector<16x333xf32>,
    return
  }
  func.func @transform_0(%arg0: i32) -> (i32, i32) {
    %c0_i32 = arith.constant 0 : i32
    %c0_i32_0 = arith.constant 0 : i32
    return %arg0, %c0_i32 : i32, i32
  }
  func.func @transform_1(%arg0: i32) -> (i32, i32) {
    %c0_i32 = arith.constant 0 : i32
    %c0_i32_0 = arith.constant 0 : i32
    %c0_i32_1 = arith.constant 0 : i32
    return %c0_i32, %c0_i32_0 : i32, i32
  }
  func.func @transform_2(%arg0: i32) -> (i32, i32) {
    %c0_i32 = arith.constant 0 : i32
    %c0_i32_0 = arith.constant 0 : i32
    %c0_i32_1 = arith.constant 0 : i32
    return %c0_i32, %c0_i32_0 : i32, i32
  }
  func.func @transform_3(%arg0: i32) -> (i32, i32) {
    %c0_i32 = arith.constant 0 : i32
    %c0_i32_0 = arith.constant 0 : i32
    %c0_i32_1 = arith.constant 0 : i32
    return %c0_i32, %c0_i32_0 : i32, i32
  }
  func.func @transform_4(%arg0: i32) -> (i32, i32) {
    %c0_i32 = arith.constant 0 : i32
    %c0_i32_0 = arith.constant 0 : i32
    %c0_i32_1 = arith.constant 0 : i32
    return %c0_i32, %c0_i32_0 : i32, i32
  }
  func.func @transform_5(%arg0: i32) -> (i32, i32) {
    %c0_i32 = arith.constant 0 : i32
    %c0_i32_0 = arith.constant 0 : i32
    %c0_i32_1 = arith.constant 0 : i32
    return %c0_i32, %c0_i32_0 : i32, i32
  }
  func.func @transform_6(%arg0: i32) -> (i32, i32) {
    %c0_i32 = arith.constant 0 : i32
    %c0_i32_0 = arith.constant 0 : i32
    %c0_i32_1 = arith.constant 0 : i32
    return %c0_i32, %c0_i32_0 : i32, i32
  }
  func.func @transform_7(%arg0: i32) -> (i32, i32) {
    %c0_i32 = arith.constant 0 : i32
    %c0_i32_0 = arith.constant 0 : i32
    %c0_i32_1 = arith.constant 0 : i32
    return %c0_i32, %c0_i32_0 : i32, i32
  }
  func.func @transform_8(%arg0: i32) -> (i32, i32) {
    %c0_i32 = arith.constant 0 : i32
    %c0_i32_0 = arith.constant 0 : i32
    %c0_i32_1 = arith.constant 0 : i32
    return %c0_i32, %c0_i32_0 : i32, i32
  }
  func.func @transform_9(%arg0: i32) -> (i32, i32) {
    %c0_i32 = arith.constant 0 : i32
    %c0_i32_0 = arith.constant 0 : i32
    return %arg0, %c0_i32 : i32, i32
  }
}

</mosaic_0001>

<llo_original>
// kernel: tpu_custom_call.1
$region0: #{tpu_custom_call.1}
  #allocation0 [shape = 'u32[]', space=smem, size = 0x4, offset = 0x4, fixed_abs, tag = 'smem constant byte address 0x4 - core index']
  #allocation1 [shape = 'u32[144,128]{1,0:T(1,128)}', space=vmem, size = 0x12000, scoped, tag = 'internal scratch']
  %s0 = inlined_call_operand.vmem [shape: f32[16,64], index: 0, kind: input, shape index: {}]
  %s1 = inlined_call_operand.vmem [shape: bf16[64,128], index: 1, kind: input, shape index: {}]
  %s2 = inlined_call_operand.vmem [shape: f32[1,128], index: 2, kind: input, shape index: {}]
  %s3 = inlined_call_operand.vmem [shape: bf16[128,128], index: 3, kind: input, shape index: {}]
  %s4 = inlined_call_operand.vmem [shape: f32[1,128], index: 4, kind: input, shape index: {}]
  %s5 = inlined_call_operand.vmem [shape: bf16[128,128], index: 5, kind: input, shape index: {}]
  %s6 = inlined_call_operand.vmem [shape: f32[1,128], index: 6, kind: input, shape index: {}]
  %s7 = inlined_call_operand.vmem [shape: bf16[128,333], index: 7, kind: input, shape index: {}]
  %s8 = inlined_call_operand.vmem [shape: f32[1,333], index: 8, kind: input, shape index: {}]
  %s9 = inlined_call_operand.hbm [shape: f32[16,333], index: 9, kind: output, shape index: {}]
  %s10 = sld [smem:[#allocation0]]
  $region46: #{tpu_custom_call.1} parent=0
    _
  %s12 = ssub.s32 1, %s10
  %s13 = scalar_select 0, %s12, %s10
  $region1: #{tpu_custom_call.1} parent=0
    #allocation2 [shape = 'u8[24576]{0}', space=vmem, size = 0x6000, scoped, tag = 'output window, operand 0, single buffered']
    #allocation3 [shape = 's32[1]{0}', space=sflag, size = 0x4, scoped, tag = 'scoped memory for tpu_custom_call.1']
    %14 = vsyncpa [#allocation3], 0
    // Predicated region
    $region2: #{tpu_custom_call.1} parent=1 // pred_check
      _
    $region3: #{tpu_custom_call.1} parent=1 // pred_check_branch
      %16 = sbr.rel (0) target = $region5
    $region4: #{tpu_custom_call.1} parent=1 // pred_region
      _
    $region5: #{tpu_custom_call.1} parent=1 // pred_fallthru
      _
    // Predicated region
    $region6: #{tpu_custom_call.1} parent=1 // pred_check
      _
    $region7: #{tpu_custom_call.1} parent=1 // pred_check_branch
      %18 = sbr.rel (0) target = $region9
    $region8: #{tpu_custom_call.1} parent=1 // pred_region
      _
    $region9: #{tpu_custom_call.1} parent=1 // pred_fallthru
      _
    // Predicated region
    $region10: #{tpu_custom_call.1} parent=1 // pred_check
      _
    $region11: #{tpu_custom_call.1} parent=1 // pred_check_branch
      %20 = sbr.rel (0) target = $region13
    $region12: #{tpu_custom_call.1} parent=1 // pred_region
      _
    $region13: #{tpu_custom_call.1} parent=1 // pred_fallthru
      _
    // Predicated region
    $region14: #{tpu_custom_call.1} parent=1 // pred_check
      _
    $region15: #{tpu_custom_call.1} parent=1 // pred_check_branch
      %22 = sbr.rel (0) target = $region17
    $region16: #{tpu_custom_call.1} parent=1 // pred_region
      _
    $region17: #{tpu_custom_call.1} parent=1 // pred_fallthru
      _
    // Predicated region
    $region18: #{tpu_custom_call.1} parent=1 // pred_check
      _
    $region19: #{tpu_custom_call.1} parent=1 // pred_check_branch
      %24 = sbr.rel (0) target = $region21
    $region20: #{tpu_custom_call.1} parent=1 // pred_region
      _
    $region21: #{tpu_custom_call.1} parent=1 // pred_fallthru
      _
    // Predicated region
    $region22: #{tpu_custom_call.1} parent=1 // pred_check
      _
    $region23: #{tpu_custom_call.1} parent=1 // pred_check_branch
      %26 = sbr.rel (0) target = $region25
    $region24: #{tpu_custom_call.1} parent=1 // pred_region
      _
    $region25: #{tpu_custom_call.1} parent=1 // pred_fallthru
      _
    // Predicated region
    $region26: #{tpu_custom_call.1} parent=1 // pred_check
      _
    $region27: #{tpu_custom_call.1} parent=1 // pred_check_branch
      %28 = sbr.rel (0) target = $region29
    $region28: #{tpu_custom_call.1} parent=1 // pred_region
      _
    $region29: #{tpu_custom_call.1} parent=1 // pred_fallthru
      _
    // Predicated region
    $region30: #{tpu_custom_call.1} parent=1 // pred_check
      _
    $region31: #{tpu_custom_call.1} parent=1 // pred_check_branch
      %30 = sbr.rel (0) target = $region33
    $region32: #{tpu_custom_call.1} parent=1 // pred_region
      _
    $region33: #{tpu_custom_call.1} parent=1 // pred_fallthru
      _
    // Predicated region
    $region34: #{tpu_custom_call.1} parent=1 // pred_check
      _
    $region35: #{tpu_custom_call.1} parent=1 // pred_check_branch
      %32 = sbr.rel (0) target = $region37
    $region36: #{tpu_custom_call.1} parent=1 // pred_region
      _
    $region37: #{tpu_custom_call.1} parent=1 // pred_fallthru
      _
    %v34 = vld [vmem:[%s0] sm:$0xff]
    %v35 = vld [vmem:[%s0 + $0x8] sm:$0xff]
    %v36 = vpack.c.bf16 %v35, %v34
    %v37 = vld [vmem:[%s1] sm:$0xf]
    %v38 = vld [vmem:[%s1 + $0x4] sm:$0xf]
    %v39 = vld [vmem:[%s1 + $0x8] sm:$0xf]
    %v40 = vld [vmem:[%s1 + $0xc] sm:$0xf]
    %v41 = vld [vmem:[%s1 + $0x10] sm:$0xf]
    %v42 = vld [vmem:[%s1 + $0x14] sm:$0xf]
    %v43 = vld [vmem:[%s1 + $0x18] sm:$0xf]
    %v44 = vld [vmem:[%s1 + $0x1c] sm:$0xf]
    %v45 = vld [vmem:[%s2] sm:$0x1]
    %v47 = vlaneseq
    %v48 = vshrl.u32 %v47, 7
    %v49 = vsub.s32 0, %v48
    %v50 = vrot.slane %v45, %v49
    %v60 = vunpack.c.l.b16 %v37
    %v61 = vunpack.c.l.b16 %v38
    %v62 = vunpack.c.l.b16 %v39
    %v63 = vunpack.c.l.b16 %v40
    %v64 = vunpack.c.l.b16 %v41
    %v65 = vunpack.c.l.b16 %v42
    %v66 = vunpack.c.l.b16 %v43
    %v67 = vunpack.c.l.b16 %v44
    %v68 = vpack.c.b16 %v61, %v60
    %v69 = vpack.c.b16 %v63, %v62
    %v70 = vpack.c.b16 %v65, %v64
    %v71 = vpack.c.b16 %v67, %v66
    %vm76 = vcmask 523264
    %v78 = vsel %vm76, %v36, 0
    %80 = vmatprep.subr.bf16.mxu0 0
    %81 = vmatpush1.bf16.msra.mxu0 %v68
    %82 = vmatprep.subr.bf16.mxu0 0
    %83 = vmatpush1.bf16.msra.mxu0 %v69
    %84 = vmatprep.subr.bf16.mxu0 0
    %85 = vmatpush1.bf16.msra.mxu0 %v70
    %86 = vmatprep.subr.bf16.mxu0 0
    %87 = vmatpush1.bf16.msra.mxu0 %v71
    %88 = vmatprep.subr.bf16.mxu0 0
    %89 = vmatpush1.bf16.msra.mxu0 0
    %90 = vmatprep.subr.bf16.mxu0 0
    %91 = vmatpush1.bf16.msra.mxu0 0
    %92 = vmatprep.subr.bf16.mxu0 0
    %93 = vmatpush1.bf16.msra.mxu0 0
    %94 = vmatprep.subr.bf16.mxu0 0
    %95 = vmatpush1.bf16.msra.mxu0 0
    %96 = vmatprep.subr.bf16.mxu0 0
    %97 = vmatpush1.bf16.msra.mxu0 0
    %98 = vmatprep.subr.bf16.mxu0 0
    %99 = vmatpush1.bf16.msra.mxu0 0
    %100 = vmatprep.subr.bf16.mxu0 0
    %101 = vmatpush1.bf16.msra.mxu0 0
    %102 = vmatprep.subr.bf16.mxu0 0
    %103 = vmatpush1.bf16.msra.mxu0 0
    %104 = vmatprep.subr.bf16.mxu0 0
    %105 = vmatpush1.bf16.msra.mxu0 0
    %106 = vmatprep.subr.bf16.mxu0 0
    %107 = vmatpush1.bf16.msra.mxu0 0
    %108 = vmatprep.subr.bf16.mxu0 0
    %109 = vmatpush1.bf16.msra.mxu0 0
    %110 = vmatprep.subr.bf16.mxu0 0
    %111 = vmatpush1.bf16.msra.mxu0 0
    %112 = vmatprep.mubr.bf16.mxu0 0
    %113 = vmatmul.mubr.bf16.gmra.mrb[0].mxu0 %v78
    %v114 = vpop.f32.mrb[0].mxu0
    %v115 = vadd.f32 %v50, %v114
    %v116 = vpop.f32.mrb[0].mxu0
    %v117 = vpop.f32.mrb[0].mxu0
    %v118 = vadd.f32 %v50, %v117
    %v119 = vpop.f32.mrb[0].mxu0
    %120 = vdwg.mxu0
    %v121 = vmax.f32 %v115, 0.0
    %v122 = vmax.f32 %v118, 0.0
    %v123 = vpack.c.bf16 %v122, %v121
    %v124 = vld [vmem:[%s3] sm:$0xf]
    %v125 = vld [vmem:[%s3 + $0x4] sm:$0xf]
    %v126 = vld [vmem:[%s3 + $0x8] sm:$0xf]
    %v127 = vld [vmem:[%s3 + $0xc] sm:$0xf]
    %v128 = vld [vmem:[%s3 + $0x10] sm:$0xf]
    %v129 = vld [vmem:[%s3 + $0x14] sm:$0xf]
    %v130 = vld [vmem:[%s3 + $0x18] sm:$0xf]
    %v131 = vld [vmem:[%s3 + $0x1c] sm:$0xf]
    %v132 = vld [vmem:[%s3 + $0x20] sm:$0xf]
    %v133 = vld [vmem:[%s3 + $0x24] sm:$0xf]
    %v134 = vld [vmem:[%s3 + $0x28] sm:$0xf]
    %v135 = vld [vmem:[%s3 + $0x2c] sm:$0xf]
    %v136 = vld [vmem:[%s3 + $0x30] sm:$0xf]
    %v137 = vld [vmem:[%s3 + $0x34] sm:$0xf]
    %v138 = vld [vmem:[%s3 + $0x38] sm:$0xf]
    %v139 = vld [vmem:[%s3 + $0x3c] sm:$0xf]
    %v140 = vld [vmem:[%s4] sm:$0x1]
    %v142 = vlaneseq
    %v143 = vshrl.u32 %v142, 7
    %v144 = vsub.s32 0, %v143
    %v145 = vrot.slane %v140, %v144
    %v163 = vunpack.c.l.b16 %v124
    %v164 = vunpack.c.l.b16 %v125
    %v165 = vunpack.c.l.b16 %v126
    %v166 = vunpack.c.l.b16 %v127
    %v167 = vunpack.c.l.b16 %v128
    %v168 = vunpack.c.l.b16 %v129
    %v169 = vunpack.c.l.b16 %v130
    %v170 = vunpack.c.l.b16 %v131
    %v171 = vunpack.c.l.b16 %v132
    %v172 = vunpack.c.l.b16 %v133
    %v173 = vunpack.c.l.b16 %v134
    %v174 = vunpack.c.l.b16 %v135
    %v175 = vunpack.c.l.b16 %v136
    %v176 = vunpack.c.l.b16 %v137
    %v177 = vunpack.c.l.b16 %v138
    %v178 = vunpack.c.l.b16 %v139
    %v179 = vpack.c.b16 %v164, %v163
    %v180 = vpack.c.b16 %v166, %v165
    %v181 = vpack.c.b16 %v168, %v167
    %v182 = vpack.c.b16 %v170, %v169
    %v183 = vpack.c.b16 %v172, %v171
    %v184 = vpack.c.b16 %v174, %v173
    %v185 = vpack.c.b16 %v176, %v175
    %v186 = vpack.c.b16 %v178, %v177
    %195 = vmatprep.subr.bf16.mxu0 0
    %196 = vmatpush1.bf16.msra.mxu0 %v179
    %197 = vmatprep.subr.bf16.mxu0 0
    %198 = vmatpush1.bf16.msra.mxu0 %v180
    %199 = vmatprep.subr.bf16.mxu0 0
    %200 = vmatpush1.bf16.msra.mxu0 %v181
    %201 = vmatprep.subr.bf16.mxu0 0
    %202 = vmatpush1.bf16.msra.mxu0 %v182
    %203 = vmatprep.subr.bf16.mxu0 0
    %204 = vmatpush1.bf16.msra.mxu0 %v183
    %205 = vmatprep.subr.bf16.mxu0 0
    %206 = vmatpush1.bf16.msra.mxu0 %v184
    %207 = vmatprep.subr.bf16.mxu0 0
    %208 = vmatpush1.bf16.msra.mxu0 %v185
    %209 = vmatprep.subr.bf16.mxu0 0
    %210 = vmatpush1.bf16.msra.mxu0 %v186
    %211 = vmatprep.subr.bf16.mxu0 0
    %212 = vmatpush1.bf16.msra.mxu0 0
    %213 = vmatprep.subr.bf16.mxu0 0
    %214 = vmatpush1.bf16.msra.mxu0 0
    %215 = vmatprep.subr.bf16.mxu0 0
    %216 = vmatpush1.bf16.msra.mxu0 0
    %217 = vmatprep.subr.bf16.mxu0 0
    %218 = vmatpush1.bf16.msra.mxu0 0
    %219 = vmatprep.subr.bf16.mxu0 0
    %220 = vmatpush1.bf16.msra.mxu0 0
    %221 = vmatprep.subr.bf16.mxu0 0
    %222 = vmatpush1.bf16.msra.mxu0 0
    %223 = vmatprep.subr.bf16.mxu0 0
    %224 = vmatpush1.bf16.msra.mxu0 0
    %225 = vmatprep.subr.bf16.mxu0 0
    %226 = vmatpush1.bf16.msra.mxu0 0
    %227 = vmatprep.mubr.bf16.mxu0 0
    %228 = vmatmul.mubr.bf16.gmra.mrb[0].mxu0 %v123
    %v229 = vpop.f32.mrb[0].mxu0
    %v230 = vadd.f32 %v145, %v229
    %v231 = vpop.f32.mrb[0].mxu0
    %v232 = vpop.f32.mrb[0].mxu0
    %v233 = vadd.f32 %v145, %v232
    %v234 = vpop.f32.mrb[0].mxu0
    %235 = vdwg.mxu0
    %v236 = vmax.f32 %v230, 0.0
    %v237 = vmax.f32 %v233, 0.0
    %v238 = vpack.c.bf16 %v237, %v236
    %v239 = vld [vmem:[%s5] sm:$0xf]
    %v240 = vld [vmem:[%s5 + $0x4] sm:$0xf]
    %v241 = vld [vmem:[%s5 + $0x8] sm:$0xf]
    %v242 = vld [vmem:[%s5 + $0xc] sm:$0xf]
    %v243 = vld [vmem:[%s5 + $0x10] sm:$0xf]
    %v244 = vld [vmem:[%s5 + $0x14] sm:$0xf]
    %v245 = vld [vmem:[%s5 + $0x18] sm:$0xf]
    %v246 = vld [vmem:[%s5 + $0x1c] sm:$0xf]
    %v247 = vld [vmem:[%s5 + $0x20] sm:$0xf]
    %v248 = vld [vmem:[%s5 + $0x24] sm:$0xf]
    %v249 = vld [vmem:[%s5 + $0x28] sm:$0xf]
    %v250 = vld [vmem:[%s5 + $0x2c] sm:$0xf]
    %v251 = vld [vmem:[%s5 + $0x30] sm:$0xf]
    %v252 = vld [vmem:[%s5 + $0x34] sm:$0xf]
    %v253 = vld [vmem:[%s5 + $0x38] sm:$0xf]
    %v254 = vld [vmem:[%s5 + $0x3c] sm:$0xf]
    %v255 = vld [vmem:[%s6] sm:$0x1]
    %v257 = vlaneseq
    %v258 = vshrl.u32 %v257, 7
    %v259 = vsub.s32 0, %v258
    %v260 = vrot.slane %v255, %v259
    %v278 = vunpack.c.l.b16 %v239
    %v279 = vunpack.c.l.b16 %v240
    %v280 = vunpack.c.l.b16 %v241
    %v281 = vunpack.c.l.b16 %v242
    %v282 = vunpack.c.l.b16 %v243
    %v283 = vunpack.c.l.b16 %v244
    %v284 = vunpack.c.l.b16 %v245
    %v285 = vunpack.c.l.b16 %v246
    %v286 = vunpack.c.l.b16 %v247
    %v287 = vunpack.c.l.b16 %v248
    %v288 = vunpack.c.l.b16 %v249
    %v289 = vunpack.c.l.b16 %v250
    %v290 = vunpack.c.l.b16 %v251
    %v291 = vunpack.c.l.b16 %v252
    %v292 = vunpack.c.l.b16 %v253
    %v293 = vunpack.c.l.b16 %v254
    %v294 = vpack.c.b16 %v279, %v278
    %v295 = vpack.c.b16 %v281, %v280
    %v296 = vpack.c.b16 %v283, %v282
    %v297 = vpack.c.b16 %v285, %v284
    %v298 = vpack.c.b16 %v287, %v286
    %v299 = vpack.c.b16 %v289, %v288
    %v300 = vpack.c.b16 %v291, %v290
    %v301 = vpack.c.b16 %v293, %v292
    %310 = vmatprep.subr.bf16.mxu0 0
    %311 = vmatpush1.bf16.msra.mxu0 %v294
    %312 = vmatprep.subr.bf16.mxu0 0
    %313 = vmatpush1.bf16.msra.mxu0 %v295
    %314 = vmatprep.subr.bf16.mxu0 0
    %315 = vmatpush1.bf16.msra.mxu0 %v296
    %316 = vmatprep.subr.bf16.mxu0 0
    %317 = vmatpush1.bf16.msra.mxu0 %v297
    %318 = vmatprep.subr.bf16.mxu0 0
    %319 = vmatpush1.bf16.msra.mxu0 %v298
    %320 = vmatprep.subr.bf16.mxu0 0
    %321 = vmatpush1.bf16.msra.mxu0 %v299
    %322 = vmatprep.subr.bf16.mxu0 0
    %323 = vmatpush1.bf16.msra.mxu0 %v300
    %324 = vmatprep.subr.bf16.mxu0 0
    %325 = vmatpush1.bf16.msra.mxu0 %v301
    %326 = vmatprep.subr.bf16.mxu0 0
    %327 = vmatpush1.bf16.msra.mxu0 0
    %328 = vmatprep.subr.bf16.mxu0 0
    %329 = vmatpush1.bf16.msra.mxu0 0
    %330 = vmatprep.subr.bf16.mxu0 0
    %331 = vmatpush1.bf16.msra.mxu0 0
    %332 = vmatprep.subr.bf16.mxu0 0
    %333 = vmatpush1.bf16.msra.mxu0 0
    %334 = vmatprep.subr.bf16.mxu0 0
    %335 = vmatpush1.bf16.msra.mxu0 0
    %336 = vmatprep.subr.bf16.mxu0 0
    %337 = vmatpush1.bf16.msra.mxu0 0
    %338 = vmatprep.subr.bf16.mxu0 0
    %339 = vmatpush1.bf16.msra.mxu0 0
    %340 = vmatprep.subr.bf16.mxu0 0
    %341 = vmatpush1.bf16.msra.mxu0 0
    %342 = vmatprep.mubr.bf16.mxu0 0
    %343 = vmatmul.mubr.bf16.gmra.mrb[0].mxu0 %v238
    %v344 = vpop.f32.mrb[0].mxu0
    %v345 = vadd.f32 %v260, %v344
    %v346 = vpop.f32.mrb[0].mxu0
    %v347 = vpop.f32.mrb[0].mxu0
    %v348 = vadd.f32 %v260, %v347
    %v349 = vpop.f32.mrb[0].mxu0
    %350 = vdwg.mxu0
    %v351 = vmax.f32 %v345, 0.0
    %v352 = vmax.f32 %v348, 0.0
    %v353 = vpack.c.bf16 %v352, %v351
    %v354 = vld [vmem:[%s7] sm:$0xff]
    %v355 = vld [vmem:[%s7 + $0x8] sm:$0xf]
    %v356 = vld [vmem:[%s7 + $0xc] sm:$0xff]
    %v357 = vld [vmem:[%s7 + $0x14] sm:$0xf]
    %v358 = vld [vmem:[%s7 + $0x18] sm:$0xff]
    %v359 = vld [vmem:[%s7 + $0x20] sm:$0xf]
    %v360 = vld [vmem:[%s7 + $0x24] sm:$0xff]
    %v361 = vld [vmem:[%s7 + $0x2c] sm:$0xf]
    %v362 = vld [vmem:[%s7 + $0x30] sm:$0xff]
    %v363 = vld [vmem:[%s7 + $0x38] sm:$0xf]
    %v364 = vld [vmem:[%s7 + $0x3c] sm:$0xff]
    %v365 = vld [vmem:[%s7 + $0x44] sm:$0xf]
    %v366 = vld [vmem:[%s7 + $0x48] sm:$0xff]
    %v367 = vld [vmem:[%s7 + $0x50] sm:$0xf]
    %v368 = vld [vmem:[%s7 + $0x54] sm:$0xff]
    %v369 = vld [vmem:[%s7 + $0x5c] sm:$0xf]
    %v370 = vld [vmem:[%s7 + $0x60] sm:$0xff]
    %v371 = vld [vmem:[%s7 + $0x68] sm:$0xf]
    %v372 = vld [vmem:[%s7 + $0x6c] sm:$0xff]
    %v373 = vld [vmem:[%s7 + $0x74] sm:$0xf]
    %v374 = vld [vmem:[%s7 + $0x78] sm:$0xff]
    %v375 = vld [vmem:[%s7 + $0x80] sm:$0xf]
    %v376 = vld [vmem:[%s7 + $0x84] sm:$0xff]
    %v377 = vld [vmem:[%s7 + $0x8c] sm:$0xf]
    %v378 = vld [vmem:[%s7 + $0x90] sm:$0xff]
    %v379 = vld [vmem:[%s7 + $0x98] sm:$0xf]
    %v380 = vld [vmem:[%s7 + $0x9c] sm:$0xff]
    %v381 = vld [vmem:[%s7 + $0xa4] sm:$0xf]
    %v382 = vld [vmem:[%s7 + $0xa8] sm:$0xff]
    %v383 = vld [vmem:[%s7 + $0xb0] sm:$0xf]
    %v384 = vld [vmem:[%s7 + $0xb4] sm:$0xff]
    %v385 = vld [vmem:[%s7 + $0xbc] sm:$0xf]
    %v386 = vld [vmem:[%s8] sm:$0x7]
    %v388 = vlaneseq
    %v389 = vshrl.u32 %v388, 7
    %v390 = vsub.s32 0, %v389
    %v391 = vrot.slane %v386, %v390
    %v392 = vlaneseq
    %v393 = vshrl.u32 %v392, 7
    %v394 = vsub.s32 1, %v393
    %v395 = vrot.slane %v386, %v394
    %v396 = vlaneseq
    %v397 = vshrl.u32 %v396, 7
    %v398 = vsub.s32 2, %v397
    %v399 = vrot.slane %v386, %v398
    %v435 = vunpack.c.l.b16 %v354
    %v436 = vunpack.c.h.b16 %v354
    %v437 = vunpack.c.l.b16 %v355
    %v438 = vunpack.c.l.b16 %v356
    %v439 = vunpack.c.h.b16 %v356
    %v440 = vunpack.c.l.b16 %v357
    %v441 = vunpack.c.l.b16 %v358
    %v442 = vunpack.c.h.b16 %v358
    %v443 = vunpack.c.l.b16 %v359
    %v444 = vunpack.c.l.b16 %v360
    %v445 = vunpack.c.h.b16 %v360
    %v446 = vunpack.c.l.b16 %v361
    %v447 = vunpack.c.l.b16 %v362
    %v448 = vunpack.c.h.b16 %v362
    %v449 = vunpack.c.l.b16 %v363
    %v450 = vunpack.c.l.b16 %v364
    %v451 = vunpack.c.h.b16 %v364
    %v452 = vunpack.c.l.b16 %v365
    %v453 = vunpack.c.l.b16 %v366
    %v454 = vunpack.c.h.b16 %v366
    %v455 = vunpack.c.l.b16 %v367
    %v456 = vunpack.c.l.b16 %v368
    %v457 = vunpack.c.h.b16 %v368
    %v458 = vunpack.c.l.b16 %v369
    %v459 = vunpack.c.l.b16 %v370
    %v460 = vunpack.c.h.b16 %v370
    %v461 = vunpack.c.l.b16 %v371
    %v462 = vunpack.c.l.b16 %v372
    %v463 = vunpack.c.h.b16 %v372
    %v464 = vunpack.c.l.b16 %v373
    %v465 = vunpack.c.l.b16 %v374
    %v466 = vunpack.c.h.b16 %v374
    %v467 = vunpack.c.l.b16 %v375
    %v468 = vunpack.c.l.b16 %v376
    %v469 = vunpack.c.h.b16 %v376
    %v470 = vunpack.c.l.b16 %v377
    %v471 = vunpack.c.l.b16 %v378
    %v472 = vunpack.c.h.b16 %v378
    %v473 = vunpack.c.l.b16 %v379
    %v474 = vunpack.c.l.b16 %v380
    %v475 = vunpack.c.h.b16 %v380
    %v476 = vunpack.c.l.b16 %v381
    %v477 = vunpack.c.l.b16 %v382
    %v478 = vunpack.c.h.b16 %v382
    %v479 = vunpack.c.l.b16 %v383
    %v480 = vunpack.c.l.b16 %v384
    %v481 = vunpack.c.h.b16 %v384
    %v482 = vunpack.c.l.b16 %v385
    %v483 = vpack.c.b16 %v438, %v435
    %v484 = vpack.c.b16 %v439, %v436
    %v485 = vpack.c.b16 %v440, %v437
    %v486 = vpack.c.b16 %v444, %v441
    %v487 = vpack.c.b16 %v445, %v442
    %v488 = vpack.c.b16 %v446, %v443
    %v489 = vpack.c.b16 %v450, %v447
    %v490 = vpack.c.b16 %v451, %v448
    %v491 = vpack.c.b16 %v452, %v449
    %v492 = vpack.c.b16 %v456, %v453
    %v493 = vpack.c.b16 %v457, %v454
    %v494 = vpack.c.b16 %v458, %v455
    %v495 = vpack.c.b16 %v462, %v459
    %v496 = vpack.c.b16 %v463, %v460
    %v497 = vpack.c.b16 %v464, %v461
    %v498 = vpack.c.b16 %v468, %v465
    %v499 = vpack.c.b16 %v469, %v466
    %v500 = vpack.c.b16 %v470, %v467
    %v501 = vpack.c.b16 %v474, %v471
    %v502 = vpack.c.b16 %v475, %v472
    %v503 = vpack.c.b16 %v476, %v473
    %v504 = vpack.c.b16 %v480, %v477
    %v505 = vpack.c.b16 %v481, %v478
    %v506 = vpack.c.b16 %v482, %v479
    %531 = vmatprep.subr.bf16.mxu0 %v484
    %532 = vmatpush1.bf16.msra.mxu0 %v483
    %533 = vmatprep.subr.bf16.mxu0 %v487
    %534 = vmatpush1.bf16.msra.mxu0 %v486
    %535 = vmatprep.subr.bf16.mxu0 %v490
    %536 = vmatpush1.bf16.msra.mxu0 %v489
    %537 = vmatprep.subr.bf16.mxu0 %v493
    %538 = vmatpush1.bf16.msra.mxu0 %v492
    %539 = vmatprep.subr.bf16.mxu0 %v496
    %540 = vmatpush1.bf16.msra.mxu0 %v495
    %541 = vmatprep.subr.bf16.mxu0 %v499
    %542 = vmatpush1.bf16.msra.mxu0 %v498
    %543 = vmatprep.subr.bf16.mxu0 %v502
    %544 = vmatpush1.bf16.msra.mxu0 %v501
    %545 = vmatprep.subr.bf16.mxu0 %v505
    %546 = vmatpush1.bf16.msra.mxu0 %v504
    %547 = vmatprep.subr.bf16.mxu0 0
    %548 = vmatpush1.bf16.msra.mxu0 0
    %549 = vmatprep.subr.bf16.mxu0 0
    %550 = vmatpush1.bf16.msra.mxu0 0
    %551 = vmatprep.subr.bf16.mxu0 0
    %552 = vmatpush1.bf16.msra.mxu0 0
    %553 = vmatprep.subr.bf16.mxu0 0
    %554 = vmatpush1.bf16.msra.mxu0 0
    %555 = vmatprep.subr.bf16.mxu0 0
    %556 = vmatpush1.bf16.msra.mxu0 0
    %557 = vmatprep.subr.bf16.mxu0 0
    %558 = vmatpush1.bf16.msra.mxu0 0
    %559 = vmatprep.subr.bf16.mxu0 0
    %560 = vmatpush1.bf16.msra.mxu0 0
    %561 = vmatprep.subr.bf16.mxu0 0
    %562 = vmatpush1.bf16.msra.mxu0 0
    %563 = vmatprep.mubr.bf16.mxu0 0
    %564 = vmatmul.mubr.bf16.gmra.mrb[0].mxu0 %v353
    %v565 = vpop.f32.mrb[0].mxu0
    %v566 = vadd.f32 %v391, %v565
    %v567 = vpop.f32.mrb[0].mxu0
    %v568 = vadd.f32 %v395, %v567
    %v569 = vpop.f32.mrb[0].mxu0
    %v570 = vadd.f32 %v391, %v569
    %v571 = vpop.f32.mrb[0].mxu0
    %v572 = vadd.f32 %v395, %v571
    %573 = vdwg.mxu0
    %574 = vmatprep.subr.bf16.mxu0 0
    %575 = vmatpush1.bf16.msra.mxu0 %v485
    %576 = vmatprep.subr.bf16.mxu0 0
    %577 = vmatpush1.bf16.msra.mxu0 %v488
    %578 = vmatprep.subr.bf16.mxu0 0
    %579 = vmatpush1.bf16.msra.mxu0 %v491
    %580 = vmatprep.subr.bf16.mxu0 0
    %581 = vmatpush1.bf16.msra.mxu0 %v494
    %582 = vmatprep.subr.bf16.mxu0 0
    %583 = vmatpush1.bf16.msra.mxu0 %v497
    %584 = vmatprep.subr.bf16.mxu0 0
    %585 = vmatpush1.bf16.msra.mxu0 %v500
    %586 = vmatprep.subr.bf16.mxu0 0
    %587 = vmatpush1.bf16.msra.mxu0 %v503
    %588 = vmatprep.subr.bf16.mxu0 0
    %589 = vmatpush1.bf16.msra.mxu0 %v506
    %590 = vmatprep.subr.bf16.mxu0 0
    %591 = vmatpush1.bf16.msra.mxu0 0
    %592 = vmatprep.subr.bf16.mxu0 0
    %593 = vmatpush1.bf16.msra.mxu0 0
    %594 = vmatprep.subr.bf16.mxu0 0
    %595 = vmatpush1.bf16.msra.mxu0 0
    %596 = vmatprep.subr.bf16.mxu0 0
    %597 = vmatpush1.bf16.msra.mxu0 0
    %598 = vmatprep.subr.bf16.mxu0 0
    %599 = vmatpush1.bf16.msra.mxu0 0
    %600 = vmatprep.subr.bf16.mxu0 0
    %601 = vmatpush1.bf16.msra.mxu0 0
    %602 = vmatprep.subr.bf16.mxu0 0
    %603 = vmatpush1.bf16.msra.mxu0 0
    %604 = vmatprep.subr.bf16.mxu0 0
    %605 = vmatpush1.bf16.msra.mxu0 0
    %606 = vmatprep.mubr.bf16.mxu0 0
    %607 = vmatmul.mubr.bf16.gmra.mrb[0].mxu0 %v353
    %v608 = vpop.f32.mrb[0].mxu0
    %v609 = vadd.f32 %v399, %v608
    %v610 = vpop.f32.mrb[0].mxu0
    %v611 = vpop.f32.mrb[0].mxu0
    %v612 = vadd.f32 %v399, %v611
    %v613 = vpop.f32.mrb[0].mxu0
    %614 = vdwg.mxu0
    %615 = vst [vmem:[#allocation2] sm:$0xff] %v566
    %616 = vst [vmem:[#allocation2 + $0x8] sm:$0xff] %v568
    %vm617 = vcmask 629760
    %618 = vst.msk [vmem:[#allocation2 + $0x10] sm:$0xff] %vm617, %v609
    %619 = vst [vmem:[#allocation2 + $0x18] sm:$0xff] %v570
    %620 = vst [vmem:[#allocation2 + $0x20] sm:$0xff] %v572
    %621 = vst.msk [vmem:[#allocation2 + $0x28] sm:$0xff] %vm617, %v612
    // Predicated region
    $region38: #{tpu_custom_call.1} parent=1 // pred_check
      _
    $region39: #{tpu_custom_call.1} parent=1 // pred_check_branch
      %623 = sbr.rel (0) target = $region41
    $region40: #{tpu_custom_call.1} parent=1 // pred_region
      %s625 = ssub.s32 768, 768
      %626 = vsyncadd [#allocation3], %s625
      %s627 = sshll.u32 [#allocation2], 4
      %s628 = int_to_ptr.vmem [resolvable:$true] %s627
      %633 = dma.vmem_to_hbm [thread:$0]  %s628, 768, %s9, [#allocation3], 384, 384, 24
    $region41: #{tpu_custom_call.1} parent=1 // pred_fallthru
      _
    // Predicated region
    $region42: #{tpu_custom_call.1} parent=1 // pred_check
      _
    $region43: #{tpu_custom_call.1} parent=1 // pred_check_branch
      %635 = sbr.rel (0) target = $region45
    $region44: #{tpu_custom_call.1} parent=1 // pred_region
      %636 = dma.done [#allocation3], 768
    $region45: #{tpu_custom_call.1} parent=1 // pred_fallthru
      _
    %637 = vsyncpa [#allocation3], 1

</llo_original>
